<compile_context>
chip_gen: v6e
topology: v6e:2x2x1
jax: 0.10.0
libtpu: 0.0.40
codegen_flags: <defaults>
</compile_context>

<pallas_src>
import functools

import jax
import jax.numpy as jnp
from jax.experimental import pallas as pl
from jax.experimental.pallas import tpu as pltpu


def _eml1_kernel(pred_ref, gt_ref, maskx_ref, masky_ref, out_ref, *, w_stride):
    """One grid step: B flattened (H*W,) slices -> one (1, H*W) partial sum."""
    x = gt_ref[...].astype(jnp.float32)    # (B, HW) ground truth
    p = pred_ref[...].astype(jnp.float32)  # (B, HW) prediction
    mask_x = maskx_ref[...]                # (1, HW): 1.0 where col < W-1
    mask_y = masky_ref[...]                # (1, HW): 1.0 where row < H-1
    hw = x.shape[-1]

    # Forward differences.  Lane l = h*W + w; neighbor (h, w+1) is lane l+1,
    # (h+1, w) is lane l+W.  Wrap positions are zeroed by the hoisted masks,
    # so the lane rolls never leak across row/slice boundaries.
    dfx = jnp.abs(pltpu.roll(x, shift=hw - 1, axis=1) - x) * mask_x
    dfy = jnp.abs(pltpu.roll(x, shift=hw - w_stride, axis=1) - x) * mask_y

    # Scatter-add each difference onto both of its endpoints.  The reference
    # /3 is dropped: the min/max normalization below is scale-invariant.
    edge = (dfx + pltpu.roll(dfx, shift=1, axis=1)
            + dfy + pltpu.roll(dfy, shift=w_stride, axis=1))

    # Per-slice (= per-sublane-row) min/max normalization folded into the log:
    #   w = 1 + log2((edge - mn)/(mx - mn) + 1)
    #     = (1 - log2(mx - mn)) + log2(edge + (mx - 2*mn))
    # Per-element cost: one broadcast add + one EUP log2; the per-row
    # constants are tiny (B, 1) vectors (XLU reductions + scalar-ish math).
    mn = jnp.min(edge, axis=1, keepdims=True)      # (B, 1)
    mx = jnp.max(edge, axis=1, keepdims=True)      # (B, 1)
    bias = 1.0 - jnp.log2(mx - mn)                 # (B, 1)
    w = bias + jnp.log2(edge + (mx - 2.0 * mn))    # (B, HW)

    # Per-step partial: reduce only over the slice (sublane) axis; the single
    # cross-lane reduction + mean happen outside the kernel (lane-dense out).
    out_ref[0] = jnp.sum(jnp.abs(p - x) * w, axis=0, keepdims=True)


def _pick_batch(nc, hw, target_bytes, *, align=8, min_steps=8):
    """Row-batch B: `align`-multiple, ~target_bytes per f32 input block, and
    (for large problems) small enough that the grid has >= min_steps steps.
    The caller pads nc up to a multiple of the returned B."""
    row_bytes = hw * 4
    bmax = max(align, (target_bytes // row_bytes) // align * align)
    if nc >= min_steps * align:
        # Keep enough grid steps for 2-TC sharding (v7x) + pipeline overlap.
        bmax = min(bmax, max(align, (nc // min_steps) // align * align))
    if nc <= bmax:
        return -(-nc // align) * align          # one (possibly padded) block
    # Prefer an exact divisor near bmax (no padding); otherwise pad to bmax.
    b = bmax
    while b >= max(align, bmax // 2):
        if nc % b == 0:
            return b
        b -= align
    return bmax


def eml1_loss(pred, gt, *, target_block_bytes=2 * 1024 * 1024):
    """Pallas implementation of EML1Loss.forward. pred/gt: (N, C, H, W)."""
    N, C, H, W = pred.shape
    NC, HW = N * C, H * W

    if HW % 128 != 0:
        # TODO(synk): non-128-multiple lane extents hit masked roll/store
        # paths (and degenerate tiny H*W breaks the padded-row trick); fall
        # back to the pure-JAX reference rather than a mistuned kernel.
        return _eml1_loss_ref(pred, gt)

    # Narrow dtypes (bf16) are passed through untouched; the kernel upcasts
    # per block, halving HBM traffic on the mem-bound v5e/v6e.
    pf = pred.reshape(NC, HW)
    gf = gt.reshape(NC, HW)

    align = 16 if jnp.dtype(pred.dtype).itemsize == 2 else 8
    B = _pick_batch(NC, HW, target_block_bytes, align=align)

    pad_rows = (-NC) % B
    if pad_rows:
        # Padded rows: identical linear ramp in pred and gt => |p - x| == 0
        # and a non-constant edge map => finite weight => zero contribution.
        fill = jnp.broadcast_to(jnp.arange(HW, dtype=pf.dtype), (pad_rows, HW))
        pf = jnp.concatenate([pf, fill], axis=0)
        gf = jnp.concatenate([gf, fill], axis=0)
    steps = (NC + pad_rows) // B

    # Hoisted boundary masks (constant block index -> DMA'd once, reused).
    lane = jnp.arange(HW, dtype=jnp.int32)
    maskx = ((lane % W) != (W - 1)).astype(jnp.float32).reshape(1, HW)
    masky = (lane < (H - 1) * W).astype(jnp.float32).reshape(1, HW)

    kernel = functools.partial(_eml1_kernel, w_stride=W)

    # VMEM footprint: 2 inputs x 2 pipeline buffers + ~8 full-block f32
    # temporaries Mosaic may keep live across the roll / reduction barriers.
    block_bytes = B * HW * 4
    vmem_limit = min(max(12 * block_bytes + (4 << 20), 16 << 20), 64 << 20)

    partials = pl.pallas_call(
        kernel,
        out_shape=jax.ShapeDtypeStruct((steps, 1, HW), jnp.float32),
        grid_spec=pltpu.PrefetchScalarGridSpec(
            num_scalar_prefetch=0,
            grid=(steps,),
            in_specs=[
                pl.BlockSpec((B, HW), lambda i: (i, 0)),
                pl.BlockSpec((B, HW), lambda i: (i, 0)),
                pl.BlockSpec((1, HW), lambda i: (0, 0)),
                pl.BlockSpec((1, HW), lambda i: (0, 0)),
            ],
            out_specs=pl.BlockSpec((1, 1, HW), lambda i: (i, 0, 0)),
        ),
        compiler_params=pltpu.CompilerParams(
            dimension_semantics=("parallel",),
            vmem_limit_bytes=vmem_limit,
        ),
    )(pf, gf, maskx, masky)

    # Final cross-lane reduction + mean over the ORIGINAL element count
    # (padded rows contribute exactly zero).
    return jnp.sum(partials) * (1.0 / float(NC * HW))


def _eml1_loss_ref(pred, gt):
    """Pure-JAX reference mirroring the PyTorch module, for sanity checking."""
    x = gt
    dx = jnp.abs(x[:, :, :, 1:] - x[:, :, :, :-1])
    dy = jnp.abs(x[:, :, 1:, :] - x[:, :, :-1, :])
    y = jnp.zeros_like(x)
    y = y.at[:, :, :, 1:].add(dx)
    y = y.at[:, :, :, :-1].add(dx)
    y = y.at[:, :, 1:, :].add(dy)
    y = y.at[:, :, :-1, :].add(dy)
    y = y / 3.0
    N, C, H, W = x.shape
    m = jnp.min(y.reshape(N, C, -1), axis=-1)[:, :, None, None]
    y = y - m
    v = jnp.max(y.reshape(N, C, -1), axis=-1)[:, :, None, None]
    y = y / v
    w = 1.0 + jnp.log2(y + 1.0)
    return jnp.mean(jnp.abs(pred - gt) * w)


if __name__ == "__main__":
    key = jax.random.PRNGKey(0)
    k1, k2 = jax.random.split(key)
    N, C, H, W = 2, 4, 16, 16
    pred = jax.random.normal(k1, (N, C, H, W), dtype=jnp.float32)
    gt = jax.random.normal(k2, (N, C, H, W), dtype=jnp.float32)

    loss = jax.block_until_ready(eml1_loss(pred, gt))
    ref = jax.block_until_ready(_eml1_loss_ref(pred, gt))

    assert jnp.allclose(loss, ref, rtol=1e-5, atol=1e-5), (loss, ref)
    print("KERNEL_OK")
</pallas_src>

<mosaic_0001>
module attributes {stable_mosaic.version = 11 : i64} {
  func.func @_eml1_kernel(%arg0: i32, %arg1: memref<8x256xf32, #tpu.memory_space<vmem>>, %arg2: memref<8x256xf32, #tpu.memory_space<vmem>>, %arg3: memref<1x256xf32, #tpu.memory_space<vmem>>, %arg4: memref<1x256xf32, #tpu.memory_space<vmem>>, %arg5: memref<1x1x256xf32, #tpu.memory_space<vmem>>) attributes {dimension_semantics = [#tpu.dimension_semantics<parallel>], iteration_bounds = array<i64: 1>, scalar_prefetch = 0 : i64, scratch_operands = 0 : i64, tpu.core_type = #tpu.core_type<tc>, window_params = [{transform_indices = @transform_0, window_bounds = array<i64: 8, 256>}, {transform_indices = @transform_1, window_bounds = array<i64: 8, 256>}, {pipeline_mode = #tpu.pipeline_mode<synchronous>, transform_indices = @transform_2, window_bounds = array<i64: 1, 256>}, {pipeline_mode = #tpu.pipeline_mode<synchronous>, transform_indices = @transform_3, window_bounds = array<i64: 1, 256>}, {transform_indices = @transform_4, window_bounds = array<i64: 1, 1, 256>}]} {
    %c0 = arith.constant 0 : index
    %c0_0 = arith.constant 0 : index
    %0 = vector.load %arg2[%c0, %c0_0] : memref<8x256xf32, #tpu.memory_space<vmem>>, vector<8x256xf32>
    %c0_1 = arith.constant 0 : index
    %c0_2 = arith.constant 0 : index
    %1 = vector.load %arg1[%c0_1, %c0_2] : memref<8x256xf32, #tpu.memory_space<vmem>>, vector<8x256xf32>
    %c0_3 = arith.constant 0 : index
    %c0_4 = arith.constant 0 : index
    %2 = vector.load %arg3[%c0_3, %c0_4] : memref<1x256xf32, #tpu.memory_space<vmem>>, vector<1x256xf32>
    %c0_5 = arith.constant 0 : index
    %c0_6 = arith.constant 0 : index
    %3 = vector.load %arg4[%c0_5, %c0_6] : memref<1x256xf32, #tpu.memory_space<vmem>>, vector<1x256xf32>
    %c255_i32 = arith.constant 255 : i32
    %4 = tpu.dynamic_rotate %0 by %c255_i32 dim 1 : vector<8x256xf32>, i32 -> vector<8x256xf32>
    %5 = arith.subf %4, %0 : vector<8x256xf32>
    %6 = math.absf %5 : vector<8x256xf32>
    %7 = vector.broadcast %2 : vector<1x256xf32> to vector<8x256xf32>
    %8 = arith.mulf %6, %7 : vector<8x256xf32>
    %c240_i32 = arith.constant 240 : i32
    %9 = tpu.dynamic_rotate %0 by %c240_i32 dim 1 : vector<8x256xf32>, i32 -> vector<8x256xf32>
    %10 = arith.subf %9, %0 : vector<8x256xf32>
    %11 = math.absf %10 : vector<8x256xf32>
    %12 = vector.broadcast %3 : vector<1x256xf32> to vector<8x256xf32>
    %13 = arith.mulf %11, %12 : vector<8x256xf32>
    %c1_i32 = arith.constant 1 : i32
    %14 = tpu.dynamic_rotate %8 by %c1_i32 dim 1 : vector<8x256xf32>, i32 -> vector<8x256xf32>
    %15 = arith.addf %8, %14 : vector<8x256xf32>
    %16 = arith.addf %15, %13 : vector<8x256xf32>
    %c16_i32 = arith.constant 16 : i32
    %17 = tpu.dynamic_rotate %13 by %c16_i32 dim 1 : vector<8x256xf32>, i32 -> vector<8x256xf32>
    %18 = arith.addf %16, %17 : vector<8x256xf32>
    %cst = arith.constant dense<0x7F800000> : vector<8xf32>
    %19 = vector.multi_reduction <minimumf>, %18, %cst [1] : vector<8x256xf32> to vector<8xf32>
    %20 = vector.shape_cast %19 : vector<8xf32> to vector<8x1xf32>
    %cst_7 = arith.constant dense<0xFF800000> : vector<8xf32>
    %21 = vector.multi_reduction <maximumf>, %18, %cst_7 [1] : vector<8x256xf32> to vector<8xf32>
    %22 = vector.shape_cast %21 : vector<8xf32> to vector<8x1xf32>
    %23 = arith.subf %22, %20 : vector<8x1xf32>
    %24 = math.log %23 : vector<8x1xf32>
    %cst_8 = arith.constant 2.000000e+00 : f32
    %25 = math.log %cst_8 : f32
    %26 = vector.broadcast %25 : f32 to vector<8x1xf32>
    %27 = arith.divf %24, %26 : vector<8x1xf32>
    %cst_9 = arith.constant 1.000000e+00 : f32
    %28 = vector.broadcast %cst_9 : f32 to vector<8x1xf32>
    %29 = arith.subf %28, %27 : vector<8x1xf32>
    %cst_10 = arith.constant 2.000000e+00 : f32
    %30 = vector.broadcast %cst_10 : f32 to vector<8x1xf32>
    %31 = arith.mulf %30, %20 : vector<8x1xf32>
    %32 = arith.subf %22, %31 : vector<8x1xf32>
    %33 = vector.broadcast %32 : vector<8x1xf32> to vector<8x256xf32>
    %34 = arith.addf %18, %33 : vector<8x256xf32>
    %35 = math.log %34 : vector<8x256xf32>
    %cst_11 = arith.constant 2.000000e+00 : f32
    %36 = math.log %cst_11 : f32
    %37 = vector.broadcast %36 : f32 to vector<8x256xf32>
    %38 = arith.divf %35, %37 : vector<8x256xf32>
    %39 = vector.broadcast %29 : vector<8x1xf32> to vector<8x256xf32>
    %40 = arith.addf %39, %38 : vector<8x256xf32>
    %41 = arith.subf %1, %0 : vector<8x256xf32>
    %42 = math.absf %41 : vector<8x256xf32>
    %43 = arith.mulf %42, %40 : vector<8x256xf32>
    %cst_12 = arith.constant dense<0.000000e+00> : vector<256xf32>
    %44 = vector.multi_reduction <add>, %43, %cst_12 [0] : vector<8x256xf32> to vector<256xf32>
    %45 = vector.shape_cast %44 : vector<256xf32> to vector<1x256xf32>
    %c0_13 = arith.constant 0 : index
    %c0_14 = arith.constant 0 : index
    %c0_15 = arith.constant 0 : index
    %46 = vector.load %arg5[%c0_13, %c0_14, %c0_15] : memref<1x1x256xf32, #tpu.memory_space<vmem>>, vector<1x1x256xf32>
    %47 = vector.shape_cast %46 : vector<1x1x256xf32> to vector<1x256xf32>
    %48 = vector.shape_cast %45 : vector<1x256xf32> to vector<1x1x256xf32>
    tpu.vector_store %arg5[%c0_13, %c0_14, %c0_15], %48 {strides = array<i32>} : memref<1x1x256xf32, #tpu.memory_space<vmem>>, vector<1x1x256xf32>,
    return
  }
  func.func @transform_0(%arg0: i32) -> (i32, i32) {
    %c0_i32 = arith.constant 0 : i32
    %c0_i32_0 = arith.constant 0 : i32
    return %arg0, %c0_i32 : i32, i32
  }
  func.func @transform_1(%arg0: i32) -> (i32, i32) {
    %c0_i32 = arith.constant 0 : i32
    %c0_i32_0 = arith.constant 0 : i32
    return %arg0, %c0_i32 : i32, i32
  }
  func.func @transform_2(%arg0: i32) -> (i32, i32) {
    %c0_i32 = arith.constant 0 : i32
    %c0_i32_0 = arith.constant 0 : i32
    %c0_i32_1 = arith.constant 0 : i32
    return %c0_i32, %c0_i32_0 : i32, i32
  }
  func.func @transform_3(%arg0: i32) -> (i32, i32) {
    %c0_i32 = arith.constant 0 : i32
    %c0_i32_0 = arith.constant 0 : i32
    %c0_i32_1 = arith.constant 0 : i32
    return %c0_i32, %c0_i32_0 : i32, i32
  }
  func.func @transform_4(%arg0: i32) -> (i32, i32, i32) {
    %c0_i32 = arith.constant 0 : i32
    %c0_i32_0 = arith.constant 0 : i32
    %c0_i32_1 = arith.constant 0 : i32
    return %arg0, %c0_i32, %c0_i32_0 : i32, i32, i32
  }
}

</mosaic_0001>

<llo_original>
// kernel: tpu_custom_call.1
$region0: #{tpu_custom_call.1}
  #allocation0 [shape = 'u32[]', space=smem, size = 0x4, offset = 0x4, fixed_abs, tag = 'smem constant byte address 0x4 - core index']
  #allocation1 [shape = 'u32[144,128]{1,0:T(1,128)}', space=vmem, size = 0x12000, scoped, tag = 'internal scratch']
  %s0 = inlined_call_operand.hbm [shape: f32[8,256], index: 0, kind: input, shape index: {}]
  %s1 = inlined_call_operand.hbm [shape: f32[8,256], index: 1, kind: input, shape index: {}]
  %s2 = inlined_call_operand.vmem [shape: f32[1,256], index: 2, kind: input, shape index: {}]
  %s3 = inlined_call_operand.vmem [shape: f32[1,256], index: 3, kind: input, shape index: {}]
  %s4 = inlined_call_operand.hbm [shape: f32[1,1,256], index: 4, kind: output, shape index: {}]
  %s5 = sld [smem:[#allocation0]]
  $region34: #{tpu_custom_call.1} parent=0
    _
  %s7 = ssub.s32 1, %s5
  %s8 = scalar_select 0, %s7, %s5
  $region1: #{tpu_custom_call.1} parent=0
    #allocation2 [shape = 'u8[8192]{0}', space=vmem, size = 0x2000, scoped, tag = 'input window, operand 0, single buffered']
    #allocation3 [shape = 's32[1]{0}', space=sflag, size = 0x4, scoped, tag = 'scoped memory for tpu_custom_call.1']
    #allocation4 [shape = 's32[1]{0}', space=sflag, size = 0x4, scoped, tag = 'scoped memory for tpu_custom_call.1']
    #allocation5 [shape = 'u8[8192]{0}', space=vmem, size = 0x2000, scoped, tag = 'input window, operand 1, single buffered']
    #allocation6 [shape = 's32[1]{0}', space=sflag, size = 0x4, scoped, tag = 'scoped memory for tpu_custom_call.1']
    #allocation7 [shape = 'u8[1024]{0}', space=vmem, size = 0x400, scoped, tag = 'output window, operand 0, single buffered']
    %9 = vsyncpa [#allocation3], 0
    %10 = vsyncpa [#allocation6], 0
    %11 = vsyncpa [#allocation4], 0
    // Predicated region
    $region2: #{tpu_custom_call.1} parent=1 // pred_check
      _
    $region3: #{tpu_custom_call.1} parent=1 // pred_check_branch
      %13 = sbr.rel (0) target = $region5
    $region4: #{tpu_custom_call.1} parent=1 // pred_region
      %s15 = ssub.s32 256, 256
      %16 = vsyncadd [#allocation3], %s15
      %s18 = sshll.u32 [#allocation2], 4
      %s19 = int_to_ptr.vmem [resolvable:$true] %s18
      %21 = dma.hbm_to_vmem [thread:$0]  %s0, 256, %s19, [#allocation3]
    $region5: #{tpu_custom_call.1} parent=1 // pred_fallthru
      _
    // Predicated region
    $region6: #{tpu_custom_call.1} parent=1 // pred_check
      _
    $region7: #{tpu_custom_call.1} parent=1 // pred_check_branch
      %23 = sbr.rel (0) target = $region9
    $region8: #{tpu_custom_call.1} parent=1 // pred_region
      %s25 = ssub.s32 256, 256
      %26 = vsyncadd [#allocation6], %s25
      %s28 = sshll.u32 [#allocation5], 4
      %s29 = int_to_ptr.vmem [resolvable:$true] %s28
      %31 = dma.hbm_to_vmem [thread:$0]  %s1, 256, %s29, [#allocation6]
    $region9: #{tpu_custom_call.1} parent=1 // pred_fallthru
      _
    // Predicated region
    $region10: #{tpu_custom_call.1} parent=1 // pred_check
      _
    $region11: #{tpu_custom_call.1} parent=1 // pred_check_branch
      %33 = sbr.rel (0) target = $region13
    $region12: #{tpu_custom_call.1} parent=1 // pred_region
      _
    $region13: #{tpu_custom_call.1} parent=1 // pred_fallthru
      _
    // Predicated region
    $region14: #{tpu_custom_call.1} parent=1 // pred_check
      _
    $region15: #{tpu_custom_call.1} parent=1 // pred_check_branch
      %35 = sbr.rel (0) target = $region17
    $region16: #{tpu_custom_call.1} parent=1 // pred_region
      _
    $region17: #{tpu_custom_call.1} parent=1 // pred_fallthru
      _
    // Predicated region
    $region18: #{tpu_custom_call.1} parent=1 // pred_check
      _
    $region19: #{tpu_custom_call.1} parent=1 // pred_check_branch
      %37 = sbr.rel (0) target = $region21
    $region20: #{tpu_custom_call.1} parent=1 // pred_region
      %38 = dma.done [#allocation3], 256
    $region21: #{tpu_custom_call.1} parent=1 // pred_fallthru
      _
    // Predicated region
    $region22: #{tpu_custom_call.1} parent=1 // pred_check
      _
    $region23: #{tpu_custom_call.1} parent=1 // pred_check_branch
      %40 = sbr.rel (0) target = $region25
    $region24: #{tpu_custom_call.1} parent=1 // pred_region
      %41 = dma.done [#allocation6], 256
    $region25: #{tpu_custom_call.1} parent=1 // pred_fallthru
      _
    %v42 = vld [vmem:[#allocation5] sm:$0xff]
    %v43 = vld [vmem:[#allocation5 + $0x8] sm:$0xff]
    %v44 = vld [vmem:[#allocation2] sm:$0xff]
    %v45 = vld [vmem:[#allocation2 + $0x8] sm:$0xff]
    %v46 = vld [vmem:[%s2] sm:$0x3]
    %v47 = vld [vmem:[%s3] sm:$0x3]
    %48 = vrot.lane.b32.xlu0 %v42, 127
    %v49 = vpop.permute.xlu0 %48
    %50 = vrot.lane.b32.xlu0 %v43, 127
    %v51 = vpop.permute.xlu0 %50
    %v52 = vlaneseq
    %v53 = vand.u32 %v52, 127
    %vm54 = vcmp.lt.s32.totalorder %v53, 127
    %v55 = vsel %vm54, %v49, %v51
    %v56 = vsel %vm54, %v51, %v49
    %v57 = vsub.f32 %v55, %v42
    %v58 = vsub.f32 %v56, %v43
    %v59 = vand.u32 2147483647, %v57
    %v60 = vand.u32 2147483647, %v58
    %v62 = vlaneseq
    %v63 = vshrl.u32 %v62, 7
    %v64 = vsub.s32 0, %v63
    %v65 = vrot.slane %v46, %v64
    %v66 = vlaneseq
    %v67 = vshrl.u32 %v66, 7
    %v68 = vsub.s32 1, %v67
    %v69 = vrot.slane %v46, %v68
    %v72 = vmul.f32 %v59, %v65
    %v73 = vmul.f32 %v60, %v69
    %74 = vrot.lane.b32.xlu0 %v42, 112
    %v75 = vpop.permute.xlu0 %74
    %76 = vrot.lane.b32.xlu0 %v43, 112
    %v77 = vpop.permute.xlu0 %76
    %vm78 = vcmp.lt.s32.totalorder %v53, 112
    %v79 = vsel %vm78, %v75, %v77
    %v80 = vsel %vm78, %v77, %v75
    %v81 = vsub.f32 %v79, %v42
    %v82 = vsub.f32 %v80, %v43
    %v83 = vand.u32 2147483647, %v81
    %v84 = vand.u32 2147483647, %v82
    %v86 = vlaneseq
    %v87 = vshrl.u32 %v86, 7
    %v88 = vsub.s32 0, %v87
    %v89 = vrot.slane %v47, %v88
    %v90 = vlaneseq
    %v91 = vshrl.u32 %v90, 7
    %v92 = vsub.s32 1, %v91
    %v93 = vrot.slane %v47, %v92
    %v96 = vmul.f32 %v83, %v89
    %v97 = vmul.f32 %v84, %v93
    %98 = vrot.lane.b32.xlu0 %v72, 1
    %v99 = vpop.permute.xlu0 %98
    %100 = vrot.lane.b32.xlu0 %v73, 1
    %v101 = vpop.permute.xlu0 %100
    %vm102 = vcmp.lt.s32.totalorder %v53, 1
    %v103 = vsel %vm102, %v99, %v101
    %v104 = vsel %vm102, %v101, %v99
    %v105 = vadd.f32 %v72, %v104
    %v106 = vadd.f32 %v73, %v103
    %v107 = vadd.f32 %v105, %v96
    %v108 = vadd.f32 %v106, %v97
    %109 = vrot.lane.b32.xlu0 %v96, 16
    %v110 = vpop.permute.xlu0 %109
    %111 = vrot.lane.b32.xlu0 %v97, 16
    %v112 = vpop.permute.xlu0 %111
    %vm113 = vcmp.lt.s32.totalorder %v53, 16
    %v114 = vsel %vm113, %v110, %v112
    %v115 = vsel %vm113, %v112, %v110
    %v116 = vadd.f32 %v107, %v115
    %v117 = vadd.f32 %v108, %v114
    %v118 = vmin.f32 %v116, %v117
    %119 = vmin.xlane.f32.xlu0 %v118
    %v120 = vpop.xlane.xlu0 %119
    %v121 = vmax.f32 %v116, %v117
    %122 = vmax.xlane.f32.xlu0 %v121
    %v123 = vpop.xlane.xlu0 %122
    %v124 = vsub.f32 %v123, %v120
    %v125 = vlog2.pop %v124
    %v126 = vmul.f32 %v125, 0.6931472
    %v127 = vrcp.pop 0.6931472
    %v128 = vmul.f32 %v126, %v127
    %v129 = vsub.f32 1.0, %v128
    %v130 = vmul.f32 %v120, 2.0
    %v131 = vsub.f32 %v123, %v130
    %v132 = vadd.f32 %v116, %v131
    %v133 = vadd.f32 %v117, %v131
    %v134 = vlog2.pop %v132
    %v135 = vmul.f32 %v134, 0.6931472
    %v136 = vlog2.pop %v133
    %v137 = vmul.f32 %v136, 0.6931472
    %v138 = vmul.f32 %v135, %v127
    %v139 = vmul.f32 %v137, %v127
    %v140 = vadd.f32 %v129, %v138
    %v141 = vadd.f32 %v129, %v139
    %v142 = vsub.f32 %v44, %v42
    %v143 = vsub.f32 %v45, %v43
    %v144 = vand.u32 2147483647, %v142
    %v145 = vand.u32 2147483647, %v143
    %v146 = vmul.f32 %v144, %v140
    %v147 = vmul.f32 %v145, %v141
    %v148 = vrot.slane %v146, 4
    %v149 = vadd.f32 %v146, %v148
    %v150 = vrot.slane %v149, 2
    %v151 = vadd.f32 %v149, %v150
    %v152 = vrot.slane %v151, 1
    %v153 = vadd.f32 %v151, %v152
    %v154 = vrot.slane %v147, 4
    %v155 = vadd.f32 %v147, %v154
    %v156 = vrot.slane %v155, 2
    %v157 = vadd.f32 %v155, %v156
    %v158 = vrot.slane %v157, 1
    %v159 = vadd.f32 %v157, %v158
    %v162 = vcombine.low %v153, %v159
    %v164 = vunpack.c.l.s4 1966171168
    %v165 = vunpack.c.0.s8 %v164
    %v166 = vlaneseq
    %v167 = vshrl.u32 %v166, 7
    %v168 = vsub.s32 %v165, %v167
    %v169 = vrot.slane %v162, %v168
    %v171 = vunpack.c.l.s4 1966171168
    %v172 = vunpack.c.0.s8 %v171
    %v173 = vlaneseq
    %v174 = vshrl.u32 %v173, 7
    %v175 = vsub.s32 %v172, %v174
    %v176 = vrot.slane %v169, %v175
    %v178 = vlaneseq
    %vm179 = vcmp.ge.s32.totalorder %v178, 0
    %vm180 = vcmp.lt.s32.totalorder %v178, 256
    %vm181 = vmand %vm179, %vm180
    %182 = vst.msk [vmem:[#allocation7] sm:$0x3] %vm181, %v176
    // Predicated region
    $region26: #{tpu_custom_call.1} parent=1 // pred_check
      _
    $region27: #{tpu_custom_call.1} parent=1 // pred_check_branch
      %184 = sbr.rel (0) target = $region29
    $region28: #{tpu_custom_call.1} parent=1 // pred_region
      %s186 = ssub.s32 32, 32
      %187 = vsyncadd [#allocation4], %s186
      %s189 = sshll.u32 [#allocation7], 4
      %s190 = int_to_ptr.vmem [resolvable:$true] %s189
      %192 = dma.vmem_to_hbm [thread:$0]  %s190, 32, %s4, [#allocation4]
    $region29: #{tpu_custom_call.1} parent=1 // pred_fallthru
      _
    // Predicated region
    $region30: #{tpu_custom_call.1} parent=1 // pred_check
      _
    $region31: #{tpu_custom_call.1} parent=1 // pred_check_branch
      %194 = sbr.rel (0) target = $region33
    $region32: #{tpu_custom_call.1} parent=1 // pred_region
      %195 = dma.done [#allocation4], 32
    $region33: #{tpu_custom_call.1} parent=1 // pred_fallthru
      _
    %196 = vsyncpa [#allocation3], 1
    %197 = vsyncpa [#allocation6], 1
    %198 = vsyncpa [#allocation4], 1

</llo_original>
